<compile_context>
chip_gen: v7x
topology: tpu7x:2x2x1
jax: 0.10.0
libtpu: 0.0.40
codegen_flags: <defaults>
</compile_context>

<pallas_src>
import functools
import math

import jax
import jax.numpy as jnp
from jax.experimental import pallas as pl
from jax.experimental.pallas import tpu as pltpu


def _round_up(x, m):
    return (x + m - 1) // m * m


def _gate_layer_kernel(x_ref, w_ref, b_ref, o_ref, *, d_out_pad):
    # One fused MXU matmul over [tm, d_input] x [d_input, 2*d_out_pad],
    # f32 accumulation, then split into (linear | gate) halves, f32 epilogue.
    x = x_ref[...]
    acc = jnp.dot(x, w_ref[...], preferred_element_type=jnp.float32)
    acc = acc + b_ref[...].astype(jnp.float32)
    lin = acc[:, :d_out_pad]
    gate = acc[:, d_out_pad:]
    o_ref[...] = (lin * jax.nn.sigmoid(gate)).astype(o_ref.dtype)


def prepare_gate_layer_params(w_linear, b_linear, w_gate, b_gate):
    """One-time parameter prep (call at load time, NOT per forward).

    PyTorch nn.Linear weights are [d_output, d_input]; we transpose, pad the
    output dim to a multiple of 128 (lane-dense), and concatenate the two
    weight matrices / biases into a single fused operand.
    """
    d_output, d_input = w_linear.shape
    d_out_pad = _round_up(d_output, 128)

    def prep_w(w):  # [d_output, d_input] -> [d_input, d_out_pad]
        wt = w.T
        if d_out_pad != d_output:
            wt = jnp.pad(wt, ((0, 0), (0, d_out_pad - d_output)))
        return wt

    def prep_b(b):  # [d_output] -> [d_out_pad]
        if d_out_pad != d_output:
            b = jnp.pad(b, (0, d_out_pad - d_output))
        return b

    w_fused = jnp.concatenate([prep_w(w_linear), prep_w(w_gate)], axis=1)
    b_fused = jnp.concatenate([prep_b(b_linear), prep_b(b_gate)])[None, :]
    return w_fused, b_fused, int(d_output)


@functools.partial(jax.jit, static_argnames=("d_output", "tm"))
def gate_layer_apply(x, w_fused, b_fused, *, d_output, tm=512):
    """Apply GateLayer with prepared params.

    Args:
      x:        [..., d_input]
      w_fused:  [d_input, 2*d_out_pad]  (from prepare_gate_layer_params)
      b_fused:  [1, 2*d_out_pad]
      d_output: true (unpadded) output width
      tm:       row-tile size (multiple of 8; sweep 512-1024 for big N)
    Returns:
      [..., d_output]
    """
    d_input = x.shape[-1]
    two_d_out_pad = w_fused.shape[1]
    d_out_pad = two_d_out_pad // 2

    lead = x.shape[:-1]
    n = math.prod(lead) if lead else 1
    x2 = x.reshape(n, d_input)

    # Row tile: at most tm, at least the (8-rounded) problem size.
    tm_eff = min(tm, _round_up(n, 8))
    grid = (pl.cdiv(n, tm_eff),)

    out = pl.pallas_call(
        functools.partial(_gate_layer_kernel, d_out_pad=d_out_pad),
        out_shape=jax.ShapeDtypeStruct((n, d_out_pad), x.dtype),
        grid_spec=pltpu.PrefetchScalarGridSpec(
            num_scalar_prefetch=0,
            grid=grid,
            in_specs=[
                # x tiles stream through the pipeline (double-buffered).
                pl.BlockSpec((tm_eff, d_input), lambda i: (i, 0)),
                # Fused weight + bias stay VMEM-resident across grid steps.
                pl.BlockSpec((d_input, two_d_out_pad), lambda i: (0, 0)),
                pl.BlockSpec((1, two_d_out_pad), lambda i: (0, 0)),
            ],
            out_specs=pl.BlockSpec((tm_eff, d_out_pad), lambda i: (i, 0)),
        ),
        compiler_params=pltpu.CompilerParams(
            dimension_semantics=("parallel",),      # shard rows across TCs (v7x)
            vmem_limit_bytes=64 * 1024 * 1024,
        ),
    )(x2, w_fused, b_fused)

    out = out[:, :d_output]
    return out.reshape(*lead, d_output)


def gate_layer(x, w_linear, b_linear, w_gate, b_gate):
    """Convenience one-shot wrapper (prefers the two-step flow for real use)."""
    w_fused, b_fused, d_output = prepare_gate_layer_params(
        w_linear, b_linear, w_gate, b_gate)
    return gate_layer_apply(x, w_fused, b_fused, d_output=d_output)


def _init_linear_params(key, d_input, d_output, dtype=jnp.float32):
    # Deterministic init mimicking PyTorch nn.Linear defaults
    # (uniform in [-1/sqrt(d_input), 1/sqrt(d_input)]).
    kw, kb = jax.random.split(key)
    bound = 1.0 / math.sqrt(d_input)
    w = jax.random.uniform(kw, (d_output, d_input), dtype, -bound, bound)
    b = jax.random.uniform(kb, (d_output,), dtype, -bound, bound)
    return w, b


if __name__ == "__main__":
    key = jax.random.PRNGKey(0)
    k_x, k_lin, k_gate = jax.random.split(key, 3)

    batch, seq, d_input, d_output = 2, 8, 32, 32

    x = jax.random.normal(k_x, (batch, seq, d_input), jnp.float32)
    w_linear, b_linear = _init_linear_params(k_lin, d_input, d_output)
    w_gate, b_gate = _init_linear_params(k_gate, d_input, d_output)

    # One-time parameter prep (transpose + pad + fuse) at "load" time,
    # then the jitted forward only touches the prepared operands.
    w_fused, b_fused, d_out = prepare_gate_layer_params(
        w_linear, b_linear, w_gate, b_gate)
    out = gate_layer_apply(x, w_fused, b_fused, d_output=d_out)
    out = jax.block_until_ready(out)

    # Pure-JAX reference check.
    ref = (x @ w_linear.T + b_linear) * jax.nn.sigmoid(x @ w_gate.T + b_gate)
    assert out.shape == (batch, seq, d_output)
    assert jnp.allclose(out, ref, atol=1e-5, rtol=1e-5)

    print("KERNEL_OK")
</pallas_src>

<mosaic_0001>
module attributes {stable_mosaic.version = 11 : i64} {
  func.func @_gate_layer_kernel(%arg0: i32, %arg1: memref<16x32xf32, #tpu.memory_space<vmem>>, %arg2: memref<32x256xf32, #tpu.memory_space<vmem>>, %arg3: memref<1x256xf32, #tpu.memory_space<vmem>>, %arg4: memref<16x128xf32, #tpu.memory_space<vmem>>) attributes {dimension_semantics = [#tpu.dimension_semantics<parallel>], iteration_bounds = array<i64: 1>, scalar_prefetch = 0 : i64, scratch_operands = 0 : i64, tpu.core_type = #tpu.core_type<tc>, window_params = [{transform_indices = @transform_0, window_bounds = array<i64: 16, 32>}, {pipeline_mode = #tpu.pipeline_mode<synchronous>, transform_indices = @transform_1, window_bounds = array<i64: 32, 256>}, {pipeline_mode = #tpu.pipeline_mode<synchronous>, transform_indices = @transform_2, window_bounds = array<i64: 1, 256>}, {transform_indices = @transform_3, window_bounds = array<i64: 16, 128>}]} {
    %c0 = arith.constant 0 : index
    %c0_0 = arith.constant 0 : index
    %0 = vector.load %arg1[%c0, %c0_0] : memref<16x32xf32, #tpu.memory_space<vmem>>, vector<16x32xf32>
    %c0_1 = arith.constant 0 : index
    %c0_2 = arith.constant 0 : index
    %1 = vector.load %arg2[%c0_1, %c0_2] : memref<32x256xf32, #tpu.memory_space<vmem>>, vector<32x256xf32>
    %cst = arith.constant dense<0.000000e+00> : vector<16x256xf32>
    %2 = tpu.matmul %0, %1, %cst {dimension_numbers = #tpu.dot_dimension_numbers<[1], [0], [0], [1], [0, 0, 1, 1], [], []>} : vector<16x32xf32>, vector<32x256xf32>, vector<16x256xf32> -> vector<16x256xf32>
    %c0_3 = arith.constant 0 : index
    %c0_4 = arith.constant 0 : index
    %3 = vector.load %arg3[%c0_3, %c0_4] : memref<1x256xf32, #tpu.memory_space<vmem>>, vector<1x256xf32>
    %4 = vector.broadcast %3 : vector<1x256xf32> to vector<16x256xf32>
    %5 = arith.addf %2, %4 : vector<16x256xf32>
    %6 = vector.extract_strided_slice %5 {offsets = [0, 0], sizes = [16, 128], strides = [1, 1]} : vector<16x256xf32> to vector<16x128xf32>
    %7 = vector.extract_strided_slice %5 {offsets = [0, 128], sizes = [16, 128], strides = [1, 1]} : vector<16x256xf32> to vector<16x128xf32>
    %8 = arith.negf %7 : vector<16x128xf32>
    %9 = math.exp %8 : vector<16x128xf32>
    %cst_5 = arith.constant 1.000000e+00 : f32
    %10 = vector.broadcast %cst_5 : f32 to vector<16x128xf32>
    %11 = arith.addf %10, %9 : vector<16x128xf32>
    %12 = arith.divf %10, %11 : vector<16x128xf32>
    %13 = arith.mulf %6, %12 : vector<16x128xf32>
    %c0_6 = arith.constant 0 : index
    %c0_7 = arith.constant 0 : index
    %14 = vector.load %arg4[%c0_6, %c0_7] : memref<16x128xf32, #tpu.memory_space<vmem>>, vector<16x128xf32>
    tpu.vector_store %arg4[%c0_6, %c0_7], %13 {strides = array<i32>} : memref<16x128xf32, #tpu.memory_space<vmem>>, vector<16x128xf32>,
    return
  }
  func.func @transform_0(%arg0: i32) -> (i32, i32) {
    %c0_i32 = arith.constant 0 : i32
    %c0_i32_0 = arith.constant 0 : i32
    return %arg0, %c0_i32 : i32, i32
  }
  func.func @transform_1(%arg0: i32) -> (i32, i32) {
    %c0_i32 = arith.constant 0 : i32
    %c0_i32_0 = arith.constant 0 : i32
    %c0_i32_1 = arith.constant 0 : i32
    return %c0_i32, %c0_i32_0 : i32, i32
  }
  func.func @transform_2(%arg0: i32) -> (i32, i32) {
    %c0_i32 = arith.constant 0 : i32
    %c0_i32_0 = arith.constant 0 : i32
    %c0_i32_1 = arith.constant 0 : i32
    return %c0_i32, %c0_i32_0 : i32, i32
  }
  func.func @transform_3(%arg0: i32) -> (i32, i32) {
    %c0_i32 = arith.constant 0 : i32
    %c0_i32_0 = arith.constant 0 : i32
    return %arg0, %c0_i32 : i32, i32
  }
}

</mosaic_0001>

<llo_original>
// kernel: gate_layer_apply.1
$region0: #{gate_layer_apply.1}
  #allocation0 [shape = 'u32[]', space=smem, size = 0x4, offset = 0x4, fixed_abs, tag = 'smem constant byte address 0x4 - core index']
  #allocation1 [shape = 'u32[144,128]{1,0:T(1,128)}', space=vmem, size = 0x12000, scoped, tag = 'internal scratch']
  %s0 = inlined_call_operand.hbm [shape: f32[16,32], index: 0, kind: input, shape index: {}]
  %s1 = inlined_call_operand.hbm [shape: f32[32,256], index: 1, kind: input, shape index: {}]
  %s2 = inlined_call_operand.hbm [shape: f32[1,256], index: 2, kind: input, shape index: {}]
  %s3 = inlined_call_operand.hbm [shape: f32[16,128], index: 3, kind: output, shape index: {}]
  %s4 = sld [smem:[#allocation0]]
  $region34: #{gate_layer_apply.1} parent=0
    _
  %s6 = ssub.s32 1, %s4
  %s7 = scalar_select 0, %s6, %s4
  $region1: #{gate_layer_apply.1} parent=0
    #allocation2 [shape = 'u8[8192]{0}', space=vmem, size = 0x2000, scoped, tag = 'input window, operand 0, single buffered']
    #allocation3 [shape = 's32[1]{0}', space=sflag, size = 0x4, scoped, tag = 'scoped memory for gate_layer_apply.1']
    #allocation4 [shape = 's32[1]{0}', space=sflag, size = 0x4, scoped, tag = 'scoped memory for gate_layer_apply.1']
    #allocation5 [shape = 'u8[32768]{0}', space=vmem, size = 0x8000, scoped, tag = 'input window, operand 1, single buffered']
    #allocation6 [shape = 's32[1]{0}', space=sflag, size = 0x4, scoped, tag = 'scoped memory for gate_layer_apply.1']
    #allocation7 [shape = 'u8[1024]{0}', space=vmem, size = 0x400, scoped, tag = 'input window, operand 2, single buffered']
    #allocation8 [shape = 'u8[8192]{0}', space=vmem, size = 0x2000, scoped, tag = 'output window, operand 0, single buffered']
    %8 = vsyncpa [#allocation3], 0
    %9 = vsyncpa [#allocation6], 0
    %10 = vsyncpa [#allocation4], 0
    // Predicated region
    $region2: #{gate_layer_apply.1} parent=1 // pred_check
      _
    $region3: #{gate_layer_apply.1} parent=1 // pred_check_branch
      %12 = sbr.rel (0) target = $region5
    $region4: #{gate_layer_apply.1} parent=1 // pred_region
      %s14 = ssub.s32 256, 256
      %15 = vsyncadd [#allocation3], %s14
      %s16 = sshll.u32 [#allocation2], 4
      %s17 = int_to_ptr.vmem [resolvable:$true] %s16
      %22 = dma.hbm_to_vmem [thread:$0]  %s0, 256, %s17, [#allocation3], 128, 128, 8
    $region5: #{gate_layer_apply.1} parent=1 // pred_fallthru
      _
    // Predicated region
    $region6: #{gate_layer_apply.1} parent=1 // pred_check
      _
    $region7: #{gate_layer_apply.1} parent=1 // pred_check_branch
      %24 = sbr.rel (0) target = $region9
    $region8: #{gate_layer_apply.1} parent=1 // pred_region
      %s26 = ssub.s32 1024, 1024
      %27 = vsyncadd [#allocation6], %s26
      %s28 = sshll.u32 [#allocation5], 4
      %s29 = int_to_ptr.vmem [resolvable:$true] %s28
      %34 = dma.hbm_to_vmem [thread:$0]  %s1, 1024, %s29, [#allocation6], 256, 256, 16
    $region9: #{gate_layer_apply.1} parent=1 // pred_fallthru
      _
    // Predicated region
    $region10: #{gate_layer_apply.1} parent=1 // pred_check
      _
    $region11: #{gate_layer_apply.1} parent=1 // pred_check_branch
      %36 = sbr.rel (0) target = $region13
    $region12: #{gate_layer_apply.1} parent=1 // pred_region
      %s38 = ssub.s32 32, 32
      %39 = vsyncadd [#allocation6], %s38
      %s41 = sshll.u32 [#allocation7], 4
      %s42 = int_to_ptr.vmem [resolvable:$true] %s41
      %44 = dma.hbm_to_vmem [thread:$0]  %s2, 32, %s42, [#allocation6]
    $region13: #{gate_layer_apply.1} parent=1 // pred_fallthru
      _
    // Predicated region
    $region14: #{gate_layer_apply.1} parent=1 // pred_check
      _
    $region15: #{gate_layer_apply.1} parent=1 // pred_check_branch
      %46 = sbr.rel (0) target = $region17
    $region16: #{gate_layer_apply.1} parent=1 // pred_region
      %47 = dma.done [#allocation3], 256
    $region17: #{gate_layer_apply.1} parent=1 // pred_fallthru
      _
    // Predicated region
    $region18: #{gate_layer_apply.1} parent=1 // pred_check
      _
    $region19: #{gate_layer_apply.1} parent=1 // pred_check_branch
      %49 = sbr.rel (0) target = $region21
    $region20: #{gate_layer_apply.1} parent=1 // pred_region
      %50 = dma.done [#allocation6], 1024
    $region21: #{gate_layer_apply.1} parent=1 // pred_fallthru
      _
    // Predicated region
    $region22: #{gate_layer_apply.1} parent=1 // pred_check
      _
    $region23: #{gate_layer_apply.1} parent=1 // pred_check_branch
      %52 = sbr.rel (0) target = $region25
    $region24: #{gate_layer_apply.1} parent=1 // pred_region
      %53 = dma.done [#allocation6], 32
    $region25: #{gate_layer_apply.1} parent=1 // pred_fallthru
      _
    %v54 = vld [vmem:[#allocation2] sm:$0xff]
    %v55 = vld [vmem:[#allocation2 + $0x8] sm:$0xff]
    %v56 = vld [vmem:[#allocation5] sm:$0xff]
    %v57 = vld [vmem:[#allocation5 + $0x8] sm:$0xff]
    %v58 = vld [vmem:[#allocation5 + $0x10] sm:$0xff]
    %v59 = vld [vmem:[#allocation5 + $0x18] sm:$0xff]
    %v60 = vld [vmem:[#allocation5 + $0x20] sm:$0xff]
    %v61 = vld [vmem:[#allocation5 + $0x28] sm:$0xff]
    %v62 = vld [vmem:[#allocation5 + $0x30] sm:$0xff]
    %v63 = vld [vmem:[#allocation5 + $0x38] sm:$0xff]
    %v64 = vld [vmem:[#allocation7] sm:$0x3]
    %v66 = vlaneseq
    %v67 = vshrl.u32 %v66, 7
    %v68 = vsub.s32 0, %v67
    %v69 = vrot.slane %v64, %v68
    %v70 = vlaneseq
    %v71 = vshrl.u32 %v70, 7
    %v72 = vsub.s32 1, %v71
    %v73 = vrot.slane %v64, %v72
    %vm76 = vcmask 261120
    %v78 = vsel %vm76, %v54, 0
    %v81 = vsel %vm76, %v55, 0
    %83 = vmatprep.subr.mxu0 %v57
    %84 = vmatpush1.msra.mxu0 %v56
    %85 = vmatprep.subr.mxu0 %v59
    %86 = vmatpush1.msra.mxu0 %v58
    %87 = vmatprep.subr.mxu0 %v61
    %88 = vmatpush1.msra.mxu0 %v60
    %89 = vmatprep.subr.mxu0 %v63
    %90 = vmatpush1.msra.mxu0 %v62
    %91 = vmatprep.subr.mxu0 0.0
    %92 = vmatpush1.msra.mxu0 0.0
    %93 = vmatprep.subr.mxu0 0.0
    %94 = vmatpush1.msra.mxu0 0.0
    %95 = vmatprep.subr.mxu0 0.0
    %96 = vmatpush1.msra.mxu0 0.0
    %97 = vmatprep.subr.mxu0 0.0
    %98 = vmatpush1.msra.mxu0 0.0
    %99 = vmatprep.subr.mxu0 0.0
    %100 = vmatpush1.msra.mxu0 0.0
    %101 = vmatprep.subr.mxu0 0.0
    %102 = vmatpush1.msra.mxu0 0.0
    %103 = vmatprep.subr.mxu0 0.0
    %104 = vmatpush1.msra.mxu0 0.0
    %105 = vmatprep.subr.mxu0 0.0
    %106 = vmatpush1.msra.mxu0 0.0
    %107 = vmatprep.subr.mxu0 0.0
    %108 = vmatpush1.msra.mxu0 0.0
    %109 = vmatprep.subr.mxu0 0.0
    %110 = vmatpush1.msra.mxu0 0.0
    %111 = vmatprep.subr.mxu0 0.0
    %112 = vmatpush1.msra.mxu0 0.0
    %113 = vmatprep.subr.mxu0 0.0
    %114 = vmatpush1.msra.mxu0 0.0
    %115 = vmatprep.subr.mxu0 0.0
    %116 = vmatpush1.msra.mxu0 0.0
    %117 = vmatprep.subr.mxu0 0.0
    %118 = vmatpush1.msra.mxu0 0.0
    %119 = vmatprep.subr.mxu0 0.0
    %120 = vmatpush1.msra.mxu0 0.0
    %121 = vmatprep.subr.mxu0 0.0
    %122 = vmatpush1.msra.mxu0 0.0
    %123 = vmatprep.subr.mxu0 0.0
    %124 = vmatpush1.msra.mxu0 0.0
    %125 = vmatprep.subr.mxu0 0.0
    %126 = vmatpush1.msra.mxu0 0.0
    %127 = vmatprep.subr.mxu0 0.0
    %128 = vmatpush1.msra.mxu0 0.0
    %129 = vmatprep.subr.mxu0 0.0
    %130 = vmatpush1.msra.mxu0 0.0
    %131 = vmatprep.subr.mxu0 0.0
    %132 = vmatpush1.msra.mxu0 0.0
    %133 = vmatprep.subr.mxu0 0.0
    %134 = vmatpush1.msra.mxu0 0.0
    %135 = vmatprep.subr.mxu0 0.0
    %136 = vmatpush1.msra.mxu0 0.0
    %137 = vmatprep.subr.mxu0 0.0
    %138 = vmatpush1.msra.mxu0 0.0
    %139 = vmatprep.subr.mxu0 0.0
    %140 = vmatpush1.msra.mxu0 0.0
    %141 = vmatprep.subr.mxu0 0.0
    %142 = vmatpush1.msra.mxu0 0.0
    %143 = vmatprep.subr.mxu0 0.0
    %144 = vmatpush1.msra.mxu0 0.0
    %145 = vmatprep.subr.mxu0 0.0
    %146 = vmatpush1.msra.mxu0 0.0
    %147 = vmatprep.mubr.f32.mxu0 0.0
    %148 = vmatmul.mubr.f32.gmra.mrb[0].mxu0 %v78
    %v149 = vpop.f32.mrb[0].mxu0
    %v150 = vadd.f32 %v69, %v149
    %v151 = vpop.f32.mrb[0].mxu0
    %v152 = vadd.f32 %v73, %v151
    %153 = vmatprep.mubr.f32.mxu0 0.0
    %154 = vmatmul.mubr.f32.gmra.mrb[0].mxu0 %v81
    %v155 = vpop.f32.mrb[0].mxu0
    %v156 = vadd.f32 %v69, %v155
    %v157 = vpop.f32.mrb[0].mxu0
    %v158 = vadd.f32 %v73, %v157
    %159 = vdwg.mxu0
    %v160 = vxor.u32 %v152, 2147483648
    %v161 = vxor.u32 %v158, 2147483648
    %v162 = vmul.f32 %v160, 1.442695
    %v163 = vpow.pop %v162
    %v164 = vmul.f32 %v161, 1.442695
    %v165 = vpow.pop %v164
    %v166 = vadd.f32 %v163, 1.0
    %v167 = vadd.f32 %v165, 1.0
    %v168 = vrcp.pop %v166
    %v169 = vmul.f32 1.0, %v168
    %v170 = vrcp.pop %v167
    %v171 = vmul.f32 1.0, %v170
    %v172 = vmul.f32 %v150, %v169
    %v173 = vmul.f32 %v156, %v171
    %174 = vst [vmem:[#allocation8] sm:$0xff] %v172
    %175 = vst [vmem:[#allocation8 + $0x8] sm:$0xff] %v173
    // Predicated region
    $region26: #{gate_layer_apply.1} parent=1 // pred_check
      _
    $region27: #{gate_layer_apply.1} parent=1 // pred_check_branch
      %177 = sbr.rel (0) target = $region29
    $region28: #{gate_layer_apply.1} parent=1 // pred_region
      %s179 = ssub.s32 256, 256
      %180 = vsyncadd [#allocation4], %s179
      %s181 = sshll.u32 [#allocation8], 4
      %s182 = int_to_ptr.vmem [resolvable:$true] %s181
      %187 = dma.vmem_to_hbm [thread:$0]  %s182, 256, %s3, [#allocation4], 128, 128, 8
    $region29: #{gate_layer_apply.1} parent=1 // pred_fallthru
      _
    // Predicated region
    $region30: #{gate_layer_apply.1} parent=1 // pred_check
      _
    $region31: #{gate_layer_apply.1} parent=1 // pred_check_branch
      %189 = sbr.rel (0) target = $region33
    $region32: #{gate_layer_apply.1} parent=1 // pred_region
      %190 = dma.done [#allocation4], 256
    $region33: #{gate_layer_apply.1} parent=1 // pred_fallthru
      _
    %191 = vsyncpa [#allocation3], 1
    %192 = vsyncpa [#allocation6], 1
    %193 = vsyncpa [#allocation4], 1

</llo_original>
